<compile_context>
chip_gen: v7x
topology: tpu7x:2x2x1
jax: 0.10.0
libtpu: 0.0.40
codegen_flags: <defaults>
</compile_context>

<pallas_src>
import functools

import jax
import jax.numpy as jnp
from jax import lax
from jax.experimental import pallas as pl
from jax.experimental.pallas import tpu as pltpu


def _margin_triplet_kernel(zjs_ref, zis_ref,                 # inputs (resident)
                           plain_ref, sh_ref, cnt_ref,       # per-tile outputs
                           reps_s, pos_s,                    # VMEM scratch
                           *, batch_size, tile_rows, m_param, use_cosine,
                           mm_dtype):
    b = batch_size
    n = 2 * b
    tm = tile_rows
    base = pl.multiple_of(pl.program_id(0) * tm, tm)

    # ---- normalized representations (O(N*D), cheap vs the (TM,N,D) matmul) --
    zjs = zjs_ref[...].astype(jnp.float32)                   # (B, D)
    zis = zis_ref[...].astype(jnp.float32)                   # (B, D)
    if use_cosine:
        # Row-normalize instead of dividing the (N, N) slab.  The eps clamp on
        # the squared norm matches torch's max(|x||y|, 1e-8) for all
        # non-degenerate rows (differs only for near-zero vectors).
        zjs = zjs * lax.rsqrt(
            jnp.maximum(jnp.sum(zjs * zjs, axis=-1, keepdims=True), 1e-16))
        zis = zis * lax.rsqrt(
            jnp.maximum(jnp.sum(zis * zis, axis=-1, keepdims=True), 1e-16))

    # positives: partner of row i of [zjs; zis] is the matching row of the
    # other view, so positives = [p; p] with p_i = <zjs_i, zis_i>.
    p = jnp.sum(zjs * zis, axis=-1, keepdims=True)           # (B, 1) f32

    reps_s[pl.ds(0, b), :] = zjs.astype(mm_dtype)
    reps_s[pl.ds(b, b), :] = zis.astype(mm_dtype)
    pos_s[pl.ds(0, b), :] = p
    pos_s[pl.ds(b, b), :] = p

    # ---- (TM, N) similarity slab on the MXU (no transpose materialized) -----
    reps_tile = reps_s[pl.ds(base, tm), :]                   # (TM, D)
    reps_all = reps_s[...]                                   # (N, D)
    sim = lax.dot_general(reps_tile, reps_all,
                          dimension_numbers=(((1,), (1,)), ((), ())),
                          preferred_element_type=jnp.float32)  # (TM, N)
    pos_tile = pos_s[pl.ds(base, tm), :]                     # (TM, 1)

    # ---- fused margin math + minimal masking --------------------------------
    t = sim - pos_tile + m_param                             # (TM, N)
    col = lax.broadcasted_iota(jnp.int32, (tm, n), 1)        # (TM, N)
    row = lax.broadcasted_iota(jnp.int32, (tm, 1), 0) + base # (TM, 1) global
    partner = jnp.where(row < b, row + b, row - b)           # (TM, 1)
    neg_mask = (col != row) & (col != partner)               # (TM, N)

    triplet = jnp.where(neg_mask, jnp.maximum(t, 0.0), 0.0)
    # (-sim + positives + m) > 0   <=>   t < 2m
    sh_mask = (t < 2.0 * m_param) & neg_mask

    # lane-dense per-tile partials (final tiny reduction happens in JAX)
    plain_ref[...] = jnp.full(plain_ref.shape, jnp.sum(triplet), jnp.float32)
    sh_ref[...] = jnp.full(sh_ref.shape,
                           jnp.sum(jnp.where(sh_mask, triplet, 0.0)),
                           jnp.float32)
    cnt_ref[...] = jnp.full(cnt_ref.shape,
                            jnp.sum(sh_mask.astype(jnp.int32)), jnp.int32)


def _pick_tile_rows(n, slab_budget_bytes=24 * 1024 * 1024, max_rows=512):
    """Largest divisor of n such that ~3 live (TM, N) f32 slabs fit the budget."""
    cap = max(1, min(max_rows, n, slab_budget_bytes // (3 * 4 * n)))
    tm = 1
    for d in range(1, cap + 1):
        if n % d == 0:
            tm = d
    return tm


def margin_triplet_loss(zis, zjs, *, m_param, use_cosine_similarity, semi_hard,
                        use_bf16_matmul=None, tile_rows=None):
    """JAX wrapper reproducing MarginTripletLoss.forward (returns scalar loss)."""
    b, d = zis.shape
    assert zjs.shape == (b, d)
    n = 2 * b

    if use_bf16_matmul is None:
        # bf16 MXU inputs are safe on the cosine path (normalized rows, sims in
        # [-1, 1]); keep full f32 for the raw dot-product path.
        use_bf16_matmul = bool(use_cosine_similarity)
    mm_dtype = jnp.bfloat16 if use_bf16_matmul else jnp.float32

    tm = tile_rows if tile_rows is not None else _pick_tile_rows(n)
    assert n % tm == 0, (n, tm)
    num_tiles = n // tm

    kernel = functools.partial(
        _margin_triplet_kernel,
        batch_size=b, tile_rows=tm, m_param=float(m_param),
        use_cosine=bool(use_cosine_similarity), mm_dtype=mm_dtype)

    part_shape = (num_tiles, 8, 128)
    part_spec = pl.BlockSpec((1, 8, 128), lambda i: (i, 0, 0))
    resident = pl.BlockSpec((b, d), lambda i: (0, 0))

    grid_spec = pltpu.PrefetchScalarGridSpec(
        num_scalar_prefetch=0,
        grid=(num_tiles,),
        in_specs=[resident, resident],
        out_specs=(part_spec, part_spec, part_spec),
        scratch_shapes=[
            pltpu.VMEM((n, d), mm_dtype),      # normalized [zjs; zis]
            pltpu.VMEM((n, 1), jnp.float32),   # per-row positives
        ])

    plain_parts, sh_parts, cnt_parts = pl.pallas_call(
        kernel,
        out_shape=(
            jax.ShapeDtypeStruct(part_shape, jnp.float32),
            jax.ShapeDtypeStruct(part_shape, jnp.float32),
            jax.ShapeDtypeStruct(part_shape, jnp.int32),
        ),
        grid_spec=grid_spec,
        compiler_params=pltpu.CompilerParams(
            dimension_semantics=("parallel",),
            vmem_limit_bytes=48 * 1024 * 1024),
        cost_estimate=pl.CostEstimate(
            flops=2 * n * n * d,
            transcendentals=n,
            bytes_accessed=2 * b * d * 4 + 3 * num_tiles * 8 * 128 * 4),
    )(zjs, zis)

    sum_plain = jnp.sum(plain_parts[:, 0, 0])
    sum_sh = jnp.sum(sh_parts[:, 0, 0])
    cnt_sh = jnp.sum(cnt_parts[:, 0, 0])          # exact int32 count

    if semi_hard:
        return sum_sh / cnt_sh.astype(jnp.float32)
    return sum_plain / float(n * (n - 2))


def _reference_loss(zis, zjs, *, m_param, use_cosine_similarity, semi_hard):
    """Pure-JAX reference mirroring the PyTorch module exactly."""
    b, _ = zis.shape
    n = 2 * b
    reps = jnp.concatenate([zjs, zis], axis=0).astype(jnp.float32)
    if use_cosine_similarity:
        norm = jnp.linalg.norm(reps, axis=-1, keepdims=True)
        sim = (reps @ reps.T) / jnp.maximum(norm * norm.T, 1e-8)
    else:
        sim = reps @ reps.T
    l_pos = jnp.diagonal(sim, offset=b)
    r_pos = jnp.diagonal(sim, offset=-b)
    positives = jnp.concatenate([l_pos, r_pos]).reshape(n, 1)
    eye = jnp.eye(n, dtype=bool)
    off1 = jnp.eye(n, k=b, dtype=bool)
    off2 = jnp.eye(n, k=-b, dtype=bool)
    neg_mask = jnp.logical_not(eye | off1 | off2)
    negatives = sim[neg_mask].reshape(n, n - 2)
    triplet = jnp.maximum(negatives - positives + m_param, 0.0)
    if semi_hard:
        sh_mask = (-negatives + positives + m_param) > 0.0
        return jnp.sum(jnp.where(sh_mask, triplet, 0.0)) / jnp.sum(sh_mask)
    return jnp.sum(triplet) / (n * (n - 2))


if __name__ == "__main__":
    key = jax.random.PRNGKey(0)
    k1, k2 = jax.random.split(key)
    B, D = 8, 32
    zis = jax.random.normal(k1, (B, D), dtype=jnp.float32)
    zjs = jax.random.normal(k2, (B, D), dtype=jnp.float32)

    # cosine + semi-hard, f32 MXU path (exact reference semantics)
    cfg = dict(m_param=1.0, use_cosine_similarity=True, semi_hard=True)
    loss = margin_triplet_loss(zis, zjs, use_bf16_matmul=False, **cfg)
    jax.block_until_ready(loss)
    ref = _reference_loss(zis, zjs, **cfg)
    assert jnp.allclose(loss, ref, rtol=1e-3, atol=1e-3), (loss, ref)

    # raw dot-product + plain mean (f32 path by default)
    cfg2 = dict(m_param=0.5, use_cosine_similarity=False, semi_hard=False)
    loss2 = margin_triplet_loss(zis, zjs, **cfg2)
    jax.block_until_ready(loss2)
    ref2 = _reference_loss(zis, zjs, **cfg2)
    assert jnp.allclose(loss2, ref2, rtol=1e-3, atol=1e-3), (loss2, ref2)

    # default cosine path (bf16 MXU inputs, f32 accumulation) — loose check,
    # since a borderline semi-hard entry may flip under bf16 rounding.
    loss_bf16 = margin_triplet_loss(zis, zjs, **cfg)
    jax.block_until_ready(loss_bf16)
    assert jnp.isfinite(loss_bf16), loss_bf16
    assert jnp.allclose(loss_bf16, ref, rtol=1e-1, atol=1e-1), (loss_bf16, ref)

    # exercise the multi-tile (grid > 1) row-tiled path
    loss_tiled = margin_triplet_loss(zis, zjs, use_bf16_matmul=False,
                                     tile_rows=8, **cfg)
    jax.block_until_ready(loss_tiled)
    assert jnp.allclose(loss_tiled, ref, rtol=1e-3, atol=1e-3), (loss_tiled, ref)

    print("KERNEL_OK")
</pallas_src>

<mosaic_0001>
module attributes {stable_mosaic.version = 11 : i64} {
  func.func @_margin_triplet_kernel(%arg0: i32, %arg1: memref<8x32xf32, #tpu.memory_space<vmem>>, %arg2: memref<8x32xf32, #tpu.memory_space<vmem>>, %arg3: memref<1x8x128xf32, #tpu.memory_space<vmem>>, %arg4: memref<1x8x128xf32, #tpu.memory_space<vmem>>, %arg5: memref<1x8x128xi32, #tpu.memory_space<vmem>>, %arg6: memref<16x32xf32, #tpu.memory_space<vmem>>, %arg7: memref<16x1xf32, #tpu.memory_space<vmem>>) attributes {dimension_semantics = [#tpu.dimension_semantics<parallel>], iteration_bounds = array<i64: 1>, scalar_prefetch = 0 : i64, scratch_operands = 2 : i64, tpu.core_type = #tpu.core_type<tc>, window_params = [{pipeline_mode = #tpu.pipeline_mode<synchronous>, transform_indices = @transform_0, window_bounds = array<i64: 8, 32>}, {pipeline_mode = #tpu.pipeline_mode<synchronous>, transform_indices = @transform_1, window_bounds = array<i64: 8, 32>}, {transform_indices = @transform_2, window_bounds = array<i64: 1, 8, 128>}, {transform_indices = @transform_3, window_bounds = array<i64: 1, 8, 128>}, {transform_indices = @transform_4, window_bounds = array<i64: 1, 8, 128>}]} {
    %c16_i32 = arith.constant 16 : i32
    %0 = arith.muli %arg0, %c16_i32 : i32
    %1 = tpu.assume_multiple %0, 16 : i32
    %c0 = arith.constant 0 : index
    %c0_0 = arith.constant 0 : index
    %2 = vector.load %arg1[%c0, %c0_0] : memref<8x32xf32, #tpu.memory_space<vmem>>, vector<8x32xf32>
    %c0_1 = arith.constant 0 : index
    %c0_2 = arith.constant 0 : index
    %3 = vector.load %arg2[%c0_1, %c0_2] : memref<8x32xf32, #tpu.memory_space<vmem>>, vector<8x32xf32>
    %4 = arith.mulf %2, %2 : vector<8x32xf32>
    %cst = arith.constant dense<0.000000e+00> : vector<8xf32>
    %5 = vector.multi_reduction <add>, %4, %cst [1] : vector<8x32xf32> to vector<8xf32>
    %6 = vector.shape_cast %5 : vector<8xf32> to vector<8x1xf32>
    %cst_3 = arith.constant 1.000000e-16 : f32
    %7 = vector.broadcast %cst_3 : f32 to vector<8x1xf32>
    %8 = arith.maximumf %6, %7 : vector<8x1xf32>
    %9 = math.rsqrt %8 : vector<8x1xf32>
    %10 = vector.broadcast %9 : vector<8x1xf32> to vector<8x32xf32>
    %11 = arith.mulf %2, %10 : vector<8x32xf32>
    %12 = arith.mulf %3, %3 : vector<8x32xf32>
    %cst_4 = arith.constant dense<0.000000e+00> : vector<8xf32>
    %13 = vector.multi_reduction <add>, %12, %cst_4 [1] : vector<8x32xf32> to vector<8xf32>
    %14 = vector.shape_cast %13 : vector<8xf32> to vector<8x1xf32>
    %cst_5 = arith.constant 1.000000e-16 : f32
    %15 = vector.broadcast %cst_5 : f32 to vector<8x1xf32>
    %16 = arith.maximumf %14, %15 : vector<8x1xf32>
    %17 = math.rsqrt %16 : vector<8x1xf32>
    %18 = vector.broadcast %17 : vector<8x1xf32> to vector<8x32xf32>
    %19 = arith.mulf %3, %18 : vector<8x32xf32>
    %20 = arith.mulf %11, %19 : vector<8x32xf32>
    %cst_6 = arith.constant dense<0.000000e+00> : vector<8xf32>
    %21 = vector.multi_reduction <add>, %20, %cst_6 [1] : vector<8x32xf32> to vector<8xf32>
    %22 = vector.shape_cast %21 : vector<8xf32> to vector<8x1xf32>
    %c0_7 = arith.constant 0 : index
    %c0_8 = arith.constant 0 : index
    %23 = vector.load %arg6[%c0_7, %c0_8] : memref<16x32xf32, #tpu.memory_space<vmem>>, vector<8x32xf32>
    tpu.vector_store %arg6[%c0_7, %c0_8], %11 {strides = array<i32>} : memref<16x32xf32, #tpu.memory_space<vmem>>, vector<8x32xf32>,
    %c8 = arith.constant 8 : index
    %c0_9 = arith.constant 0 : index
    %24 = vector.load %arg6[%c8, %c0_9] : memref<16x32xf32, #tpu.memory_space<vmem>>, vector<8x32xf32>
    tpu.vector_store %arg6[%c8, %c0_9], %19 {strides = array<i32>} : memref<16x32xf32, #tpu.memory_space<vmem>>, vector<8x32xf32>,
    %c0_10 = arith.constant 0 : index
    %c0_11 = arith.constant 0 : index
    %25 = vector.load %arg7[%c0_10, %c0_11] : memref<16x1xf32, #tpu.memory_space<vmem>>, vector<8x1xf32>
    tpu.vector_store %arg7[%c0_10, %c0_11], %22 {strides = array<i32>} : memref<16x1xf32, #tpu.memory_space<vmem>>, vector<8x1xf32>,
    %c8_12 = arith.constant 8 : index
    %c0_13 = arith.constant 0 : index
    %26 = vector.load %arg7[%c8_12, %c0_13] : memref<16x1xf32, #tpu.memory_space<vmem>>, vector<8x1xf32>
    tpu.vector_store %arg7[%c8_12, %c0_13], %22 {strides = array<i32>} : memref<16x1xf32, #tpu.memory_space<vmem>>, vector<8x1xf32>,
    %27 = arith.index_cast %1 : i32 to index
    %c0_14 = arith.constant 0 : index
    %28 = vector.load %arg6[%27, %c0_14] : memref<16x32xf32, #tpu.memory_space<vmem>>, vector<16x32xf32>
    %c0_15 = arith.constant 0 : index
    %c0_16 = arith.constant 0 : index
    %29 = vector.load %arg6[%c0_15, %c0_16] : memref<16x32xf32, #tpu.memory_space<vmem>>, vector<16x32xf32>
    %cst_17 = arith.constant dense<0.000000e+00> : vector<16x16xf32>
    %30 = tpu.matmul %28, %29, %cst_17 {dimension_numbers = #tpu.dot_dimension_numbers<[1], [1], [0], [0], [0, 0, 1, 0], [], []>} : vector<16x32xf32>, vector<16x32xf32>, vector<16x16xf32> -> vector<16x16xf32>
    %31 = arith.index_cast %1 : i32 to index
    %c0_18 = arith.constant 0 : index
    %32 = vector.load %arg7[%31, %c0_18] : memref<16x1xf32, #tpu.memory_space<vmem>>, vector<16x1xf32>
    %33 = vector.broadcast %32 : vector<16x1xf32> to vector<16x16xf32>
    %34 = arith.subf %30, %33 : vector<16x16xf32>
    %cst_19 = arith.constant 1.000000e+00 : f32
    %35 = vector.broadcast %cst_19 : f32 to vector<16x16xf32>
    %36 = arith.addf %34, %35 : vector<16x16xf32>
    %37 = tpu.iota {dimensions = array<i32: 1>} : vector<16x16xi32>
    %38 = tpu.iota {dimensions = array<i32: 0>} : vector<16x1xi32>
    %39 = vector.broadcast %1 : i32 to vector<16x1xi32>
    %40 = arith.addi %38, %39 : vector<16x1xi32>
    %c8_i32 = arith.constant 8 : i32
    %41 = vector.broadcast %c8_i32 : i32 to vector<16x1xi32>
    %42 = arith.cmpi slt, %40, %41 : vector<16x1xi32>
    %c8_i32_20 = arith.constant 8 : i32
    %43 = vector.broadcast %c8_i32_20 : i32 to vector<16x1xi32>
    %44 = arith.addi %40, %43 : vector<16x1xi32>
    %c8_i32_21 = arith.constant 8 : i32
    %45 = vector.broadcast %c8_i32_21 : i32 to vector<16x1xi32>
    %46 = arith.subi %40, %45 : vector<16x1xi32>
    %47 = arith.select %42, %44, %46 : vector<16x1xi1>, vector<16x1xi32>
    %48 = vector.broadcast %40 : vector<16x1xi32> to vector<16x16xi32>
    %49 = arith.cmpi ne, %37, %48 : vector<16x16xi32>
    %50 = vector.broadcast %47 : vector<16x1xi32> to vector<16x16xi32>
    %51 = arith.cmpi ne, %37, %50 : vector<16x16xi32>
    %52 = arith.andi %49, %51 : vector<16x16xi1>
    %cst_22 = arith.constant 0.000000e+00 : f32
    %53 = vector.broadcast %cst_22 : f32 to vector<16x16xf32>
    %54 = arith.maximumf %36, %53 : vector<16x16xf32>
    %cst_23 = arith.constant 0.000000e+00 : f32
    %55 = vector.broadcast %cst_23 : f32 to vector<16x16xf32>
    %56 = arith.select %52, %54, %55 : vector<16x16xi1>, vector<16x16xf32>
    %cst_24 = arith.constant 2.000000e+00 : f32
    %57 = vector.broadcast %cst_24 : f32 to vector<16x16xf32>
    %58 = arith.cmpf olt, %36, %57 : vector<16x16xf32>
    %59 = arith.andi %58, %52 : vector<16x16xi1>
    %60 = vector.shape_cast %56 : vector<16x16xf32> to vector<1x16x16xf32>
    %cst_25 = arith.constant dense<0.000000e+00> : vector<1xf32>
    %61 = vector.multi_reduction <add>, %60, %cst_25 [1, 2] : vector<1x16x16xf32> to vector<1xf32>
    %62 = vector.shape_cast %61 : vector<1xf32> to vector<1x1x1xf32>
    %63 = vector.extract %62[0, 0, 0] : f32 from vector<1x1x1xf32>
    %64 = vector.broadcast %63 : f32 to vector<1x8x128xf32>
    %c0_26 = arith.constant 0 : index
    %c0_27 = arith.constant 0 : index
    %c0_28 = arith.constant 0 : index
    %65 = vector.load %arg3[%c0_26, %c0_27, %c0_28] : memref<1x8x128xf32, #tpu.memory_space<vmem>>, vector<1x8x128xf32>
    tpu.vector_store %arg3[%c0_26, %c0_27, %c0_28], %64 {strides = array<i32>} : memref<1x8x128xf32, #tpu.memory_space<vmem>>, vector<1x8x128xf32>,
    %cst_29 = arith.constant 0.000000e+00 : f32
    %66 = vector.broadcast %cst_29 : f32 to vector<16x16xf32>
    %67 = arith.select %59, %56, %66 : vector<16x16xi1>, vector<16x16xf32>
    %68 = vector.shape_cast %67 : vector<16x16xf32> to vector<1x16x16xf32>
    %cst_30 = arith.constant dense<0.000000e+00> : vector<1xf32>
    %69 = vector.multi_reduction <add>, %68, %cst_30 [1, 2] : vector<1x16x16xf32> to vector<1xf32>
    %70 = vector.shape_cast %69 : vector<1xf32> to vector<1x1x1xf32>
    %71 = vector.extract %70[0, 0, 0] : f32 from vector<1x1x1xf32>
    %72 = vector.broadcast %71 : f32 to vector<1x8x128xf32>
    %c0_31 = arith.constant 0 : index
    %c0_32 = arith.constant 0 : index
    %c0_33 = arith.constant 0 : index
    %73 = vector.load %arg4[%c0_31, %c0_32, %c0_33] : memref<1x8x128xf32, #tpu.memory_space<vmem>>, vector<1x8x128xf32>
    tpu.vector_store %arg4[%c0_31, %c0_32, %c0_33], %72 {strides = array<i32>} : memref<1x8x128xf32, #tpu.memory_space<vmem>>, vector<1x8x128xf32>,
    %74 = arith.extui %59 : vector<16x16xi1> to vector<16x16xi32>
    %75 = vector.shape_cast %74 : vector<16x16xi32> to vector<1x16x16xi32>
    %cst_34 = arith.constant dense<0> : vector<1xi32>
    %76 = vector.multi_reduction <add>, %75, %cst_34 [1, 2] : vector<1x16x16xi32> to vector<1xi32>
    %77 = vector.shape_cast %76 : vector<1xi32> to vector<1x1x1xi32>
    %78 = vector.extract %77[0, 0, 0] : i32 from vector<1x1x1xi32>
    %79 = vector.broadcast %78 : i32 to vector<1x8x128xi32>
    %c0_35 = arith.constant 0 : index
    %c0_36 = arith.constant 0 : index
    %c0_37 = arith.constant 0 : index
    %80 = vector.load %arg5[%c0_35, %c0_36, %c0_37] : memref<1x8x128xi32, #tpu.memory_space<vmem>>, vector<1x8x128xi32>
    tpu.vector_store %arg5[%c0_35, %c0_36, %c0_37], %79 {strides = array<i32>} : memref<1x8x128xi32, #tpu.memory_space<vmem>>, vector<1x8x128xi32>,
    return
  }
  func.func @transform_0(%arg0: i32) -> (i32, i32) {
    %c0_i32 = arith.constant 0 : i32
    %c0_i32_0 = arith.constant 0 : i32
    %c0_i32_1 = arith.constant 0 : i32
    return %c0_i32, %c0_i32_0 : i32, i32
  }
  func.func @transform_1(%arg0: i32) -> (i32, i32) {
    %c0_i32 = arith.constant 0 : i32
    %c0_i32_0 = arith.constant 0 : i32
    %c0_i32_1 = arith.constant 0 : i32
    return %c0_i32, %c0_i32_0 : i32, i32
  }
  func.func @transform_2(%arg0: i32) -> (i32, i32, i32) {
    %c0_i32 = arith.constant 0 : i32
    %c0_i32_0 = arith.constant 0 : i32
    %c0_i32_1 = arith.constant 0 : i32
    return %arg0, %c0_i32, %c0_i32_0 : i32, i32, i32
  }
  func.func @transform_3(%arg0: i32) -> (i32, i32, i32) {
    %c0_i32 = arith.constant 0 : i32
    %c0_i32_0 = arith.constant 0 : i32
    %c0_i32_1 = arith.constant 0 : i32
    return %arg0, %c0_i32, %c0_i32_0 : i32, i32, i32
  }
  func.func @transform_4(%arg0: i32) -> (i32, i32, i32) {
    %c0_i32 = arith.constant 0 : i32
    %c0_i32_0 = arith.constant 0 : i32
    %c0_i32_1 = arith.constant 0 : i32
    return %arg0, %c0_i32, %c0_i32_0 : i32, i32, i32
  }
}

</mosaic_0001>

<llo_original>
// kernel: tpu_custom_call.1
$region0: #{tpu_custom_call.1}
  #allocation0 [shape = 'u32[]', space=smem, size = 0x4, offset = 0x4, fixed_abs, tag = 'smem constant byte address 0x4 - core index']
  #allocation1 [shape = 'u32[144,128]{1,0:T(1,128)}', space=vmem, size = 0x12000, scoped, tag = 'internal scratch']
  #allocation2 [shape = 'f32[16,32]{1,0:T(8,128)}', space=vmem, size = 0x2000, scoped, tag = 'scratch operand']
  #allocation3 [shape = 'f32[16,1]{1,0:T(8,128)}', space=vmem, size = 0x2000, scoped, tag = 'scratch operand']
  %s0 = inlined_call_operand.hbm [shape: f32[8,32], index: 0, kind: input, shape index: {}]
  %s1 = inlined_call_operand.hbm [shape: f32[8,32], index: 1, kind: input, shape index: {}]
  %s2 = inlined_call_operand.hbm [shape: f32[1,8,128], index: 2, kind: output, shape index: {0}]
  %s3 = inlined_call_operand.hbm [shape: f32[1,8,128], index: 3, kind: output, shape index: {1}]
  %s4 = inlined_call_operand.hbm [shape: s32[1,8,128], index: 4, kind: output, shape index: {2}]
  %5 = xla_tuple %s2, %s3, %s4
  %s6 = sld [smem:[#allocation0]]
  $region42: #{tpu_custom_call.1} parent=0
    _
  %s8 = ssub.s32 1, %s6
  %s9 = scalar_select 0, %s8, %s6
  $region1: #{tpu_custom_call.1} parent=0
    #allocation4 [shape = 'u8[4096]{0}', space=vmem, size = 0x1000, scoped, tag = 'input window, operand 0, single buffered']
    #allocation5 [shape = 's32[1]{0}', space=sflag, size = 0x4, scoped, tag = 'scoped memory for tpu_custom_call.1']
    #allocation6 [shape = 's32[1]{0}', space=sflag, size = 0x4, scoped, tag = 'scoped memory for tpu_custom_call.1']
    #allocation7 [shape = 'u8[4096]{0}', space=vmem, size = 0x1000, scoped, tag = 'input window, operand 1, single buffered']
    #allocation8 [shape = 's32[1]{0}', space=sflag, size = 0x4, scoped, tag = 'scoped memory for tpu_custom_call.1']
    #allocation9 [shape = 'u8[4096]{0}', space=vmem, size = 0x1000, scoped, tag = 'output window, operand 0, single buffered']
    #allocation10 [shape = 'u8[4096]{0}', space=vmem, size = 0x1000, scoped, tag = 'output window, operand 1, single buffered']
    #allocation11 [shape = 's32[1]{0}', space=sflag, size = 0x4, scoped, tag = 'scoped memory for tpu_custom_call.1']
    #allocation12 [shape = 'u8[4096]{0}', space=vmem, size = 0x1000, scoped, tag = 'output window, operand 2, single buffered']
    %10 = vsyncpa [#allocation5], 0
    %11 = vsyncpa [#allocation8], 0
    %12 = vsyncpa [#allocation6], 0
    %13 = vsyncpa [#allocation11], 0
    // Predicated region
    $region2: #{tpu_custom_call.1} parent=1 // pred_check
      _
    $region3: #{tpu_custom_call.1} parent=1 // pred_check_branch
      %15 = sbr.rel (0) target = $region5
    $region4: #{tpu_custom_call.1} parent=1 // pred_region
      %s17 = ssub.s32 128, 128
      %18 = vsyncadd [#allocation5], %s17
      %s20 = sshll.u32 [#allocation4], 4
      %s21 = int_to_ptr.vmem [resolvable:$true] %s20
      %23 = dma.hbm_to_vmem [thread:$0]  %s0, 128, %s21, [#allocation5]
    $region5: #{tpu_custom_call.1} parent=1 // pred_fallthru
      _
    // Predicated region
    $region6: #{tpu_custom_call.1} parent=1 // pred_check
      _
    $region7: #{tpu_custom_call.1} parent=1 // pred_check_branch
      %25 = sbr.rel (0) target = $region9
    $region8: #{tpu_custom_call.1} parent=1 // pred_region
      %s27 = ssub.s32 128, 128
      %28 = vsyncadd [#allocation8], %s27
      %s30 = sshll.u32 [#allocation7], 4
      %s31 = int_to_ptr.vmem [resolvable:$true] %s30
      %33 = dma.hbm_to_vmem [thread:$0]  %s1, 128, %s31, [#allocation8]
    $region9: #{tpu_custom_call.1} parent=1 // pred_fallthru
      _
    // Predicated region
    $region10: #{tpu_custom_call.1} parent=1 // pred_check
      _
    $region11: #{tpu_custom_call.1} parent=1 // pred_check_branch
      %35 = sbr.rel (0) target = $region13
    $region12: #{tpu_custom_call.1} parent=1 // pred_region
      %36 = dma.done [#allocation5], 128
    $region13: #{tpu_custom_call.1} parent=1 // pred_fallthru
      _
    // Predicated region
    $region14: #{tpu_custom_call.1} parent=1 // pred_check
      _
    $region15: #{tpu_custom_call.1} parent=1 // pred_check_branch
      %38 = sbr.rel (0) target = $region17
    $region16: #{tpu_custom_call.1} parent=1 // pred_region
      %39 = dma.done [#allocation8], 128
    $region17: #{tpu_custom_call.1} parent=1 // pred_fallthru
      _
    %s40 = smul.u32 0, 16
    %v41 = vld [vmem:[#allocation4] sm:$0xff]
    %v42 = vld [vmem:[#allocation7] sm:$0xff]
    %v43 = vmul.f32 %v41, %v41
    %vm44 = vcmask 261120
    %v45 = vsel %vm44, %v43, 0.0
    %46 = vadd.xlane.f32.xlu0 %v45
    %v47 = vpop.xlane.xlu0 %46
    %v48 = vmax.f32 %v47, 1e-16
    %v49 = vrsqrt.pop %v48
    %v50 = vmul.f32 %v41, %v49
    %v51 = vmul.f32 %v42, %v42
    %v52 = vsel %vm44, %v51, 0.0
    %53 = vadd.xlane.f32.xlu0 %v52
    %v54 = vpop.xlane.xlu0 %53
    %v55 = vmax.f32 %v54, 1e-16
    %v56 = vrsqrt.pop %v55
    %v57 = vmul.f32 %v42, %v56
    %v58 = vmul.f32 %v50, %v57
    %v59 = vsel %vm44, %v58, 0.0
    %60 = vadd.xlane.f32.xlu0 %v59
    %v61 = vpop.xlane.xlu0 %60
    %62 = vst.msk [vmem:[#allocation2] sm:$0xff] %vm44, %v50
    %63 = vst.msk [vmem:[#allocation2 + $0x8] sm:$0xff] %vm44, %v57
    %vm64 = vcmask 7168
    %65 = vst.msk [vmem:[#allocation3] sm:$0xff] %vm64, %v61
    %66 = vst.msk [vmem:[#allocation3 + $0x8] sm:$0xff] %vm64, %v61
    %s67 = scalar_lea.vmem [#allocation2], %s40
    %v68 = vld [vmem:[%s67] sm:$0xff]
    %v69 = vld [vmem:[%s67 + $0x8] sm:$0xff]
    %v70 = vld [vmem:[#allocation2] sm:$0xff]
    %v71 = vld [vmem:[#allocation2 + $0x8] sm:$0xff]
    %v73 = vsel %vm44, %v68, 0
    %v76 = vsel %vm44, %v69, 0
    %v79 = vsel %vm44, %v70, 0
    %v82 = vsel %vm44, %v71, 0
    %84 = vmatprep.subr.mxu0 0.0
    %85 = vmatpush1.xpose.msra.mxu0 %v79
    %86 = vmatprep.subr.mxu0 0.0
    %87 = vmatpush1.xpose.msra.mxu0 %v82
    %88 = vmatprep.subr.mxu0 0.0
    %89 = vmatpush1.xpose.msra.mxu0 0.0
    %90 = vmatprep.subr.mxu0 0.0
    %91 = vmatpush1.xpose.msra.mxu0 0.0
    %92 = vmatprep.subr.mxu0 0.0
    %93 = vmatpush1.xpose.msra.mxu0 0.0
    %94 = vmatprep.subr.mxu0 0.0
    %95 = vmatpush1.xpose.msra.mxu0 0.0
    %96 = vmatprep.subr.mxu0 0.0
    %97 = vmatpush1.xpose.msra.mxu0 0.0
    %98 = vmatprep.subr.mxu0 0.0
    %99 = vmatpush1.xpose.msra.mxu0 0.0
    %100 = vmatprep.subr.mxu0 0.0
    %101 = vmatpush1.xpose.msra.mxu0 0.0
    %102 = vmatprep.subr.mxu0 0.0
    %103 = vmatpush1.xpose.msra.mxu0 0.0
    %104 = vmatprep.subr.mxu0 0.0
    %105 = vmatpush1.xpose.msra.mxu0 0.0
    %106 = vmatprep.subr.mxu0 0.0
    %107 = vmatpush1.xpose.msra.mxu0 0.0
    %108 = vmatprep.subr.mxu0 0.0
    %109 = vmatpush1.xpose.msra.mxu0 0.0
    %110 = vmatprep.subr.mxu0 0.0
    %111 = vmatpush1.xpose.msra.mxu0 0.0
    %112 = vmatprep.subr.mxu0 0.0
    %113 = vmatpush1.xpose.msra.mxu0 0.0
    %114 = vmatprep.subr.mxu0 0.0
    %115 = vmatpush1.xpose.msra.mxu0 0.0
    %116 = vmatprep.subr.mxu0 0.0
    %117 = vmatpush1.xpose.msra.mxu0 0.0
    %118 = vmatprep.subr.mxu0 0.0
    %119 = vmatpush1.xpose.msra.mxu0 0.0
    %120 = vmatprep.subr.mxu0 0.0
    %121 = vmatpush1.xpose.msra.mxu0 0.0
    %122 = vmatprep.subr.mxu0 0.0
    %123 = vmatpush1.xpose.msra.mxu0 0.0
    %124 = vmatprep.subr.mxu0 0.0
    %125 = vmatpush1.xpose.msra.mxu0 0.0
    %126 = vmatprep.subr.mxu0 0.0
    %127 = vmatpush1.xpose.msra.mxu0 0.0
    %128 = vmatprep.subr.mxu0 0.0
    %129 = vmatpush1.xpose.msra.mxu0 0.0
    %130 = vmatprep.subr.mxu0 0.0
    %131 = vmatpush1.xpose.msra.mxu0 0.0
    %132 = vmatprep.subr.mxu0 0.0
    %133 = vmatpush1.xpose.msra.mxu0 0.0
    %134 = vmatprep.subr.mxu0 0.0
    %135 = vmatpush1.xpose.msra.mxu0 0.0
    %136 = vmatprep.subr.mxu0 0.0
    %137 = vmatpush1.xpose.msra.mxu0 0.0
    %138 = vmatprep.subr.mxu0 0.0
    %139 = vmatpush1.xpose.msra.mxu0 0.0
    %140 = vmatprep.subr.mxu0 0.0
    %141 = vmatpush1.xpose.msra.mxu0 0.0
    %142 = vmatprep.subr.mxu0 0.0
    %143 = vmatpush1.xpose.msra.mxu0 0.0
    %144 = vmatprep.subr.mxu0 0.0
    %145 = vmatpush1.xpose.msra.mxu0 0.0
    %146 = vmatprep.subr.mxu0 0.0
    %147 = vmatpush1.xpose.msra.mxu0 0.0
    %148 = vmatprep.mubr.f32.mxu0 0.0
    %149 = vmatmul.mubr.f32.gmra.mrb[0].mxu0 %v73
    %v150 = vpop.f32.mrb[0].mxu0
    %v151 = vadd.f32 0.0, %v150
    %v152 = vpop.f32.mrb[0].mxu0
    %153 = vmatprep.mubr.f32.mxu0 0.0
    %154 = vmatmul.mubr.f32.gmra.mrb[0].mxu0 %v76
    %v155 = vpop.f32.mrb[0].mxu0
    %v156 = vadd.f32 0.0, %v155
    %v157 = vpop.f32.mrb[0].mxu0
    %158 = vdwg.mxu0
    %s159 = scalar_lea.vmem [#allocation3], %s40
    %v160 = vld [vmem:[%s159] sm:$0xff]
    %v161 = vld [vmem:[%s159 + $0x8] sm:$0xff]
    %163 = vset.pattern.permute.xlu0 0
    %164 = vperm.xlu0 %163, %v160
    %v165 = vpop.permute.xlu0 %164
    %168 = vset.pattern.permute.xlu0 0
    %169 = vperm.xlu0 %168, %v161
    %v170 = vpop.permute.xlu0 %169
    %v172 = vsub.f32 %v151, %v165
    %v173 = vsub.f32 %v156, %v170
    %v174 = vadd.f32 %v172, 1.0
    %v175 = vadd.f32 %v173, 1.0
    %v176 = vlaneseq
    %v177 = vand.u32 %v176, 127
    %v178 = vlaneseq
    %v179 = vshrl.u32 %v178, 7
    %v180 = vadd.s32 %v179, 8
    %v181 = vstv %s40
    %v182 = vadd.s32 %v179, %v181
    %v183 = vadd.s32 %v180, %v181
    %vm184 = vcmp.lt.s32.totalorder %v182, 8
    %vm185 = vcmp.lt.s32.totalorder %v183, 8
    %v186 = vadd.s32 %v182, 8
    %v187 = vadd.s32 %v183, 8
    %v188 = vsub.s32 %v182, 8
    %v189 = vsub.s32 %v183, 8
    %v190 = vsel %vm184, %v186, %v188
    %v191 = vsel %vm185, %v187, %v189
    %vm192 = vcmp.ne.s32.totalorder %v177, %v182
    %vm193 = vcmp.ne.s32.totalorder %v177, %v183
    %vm194 = vcmp.ne.s32.totalorder %v177, %v190
    %vm195 = vcmp.ne.s32.totalorder %v177, %v191
    %vm196 = vmand %vm192, %vm194
    %vm197 = vmand %vm193, %vm195
    %v198 = vmax.f32 %v174, 0.0
    %v199 = vmax.f32 %v175, 0.0
    %v200 = vsel %vm196, %v198, 0.0
    %v201 = vsel %vm197, %v199, 0.0
    %vm202 = vcmp.lt.f32.partialorder %v174, 2.0
    %vm203 = vcmp.lt.f32.partialorder %v175, 2.0
    %vm204 = vmand %vm202, %vm196
    %vm205 = vmand %vm203, %vm197
    %vm206 = vcmask 130048
    %v207 = vsel %vm206, %v200, 0.0
    %v208 = vsel %vm206, %v201, 0.0
    %v209 = vadd.f32 %v207, %v208
    %210 = vadd.xlane.f32.xlu0 %v209
    %v211 = vpop.xlane.xlu0 %210
    %v212 = vrot.slane %v211, 4
    %v213 = vadd.f32 %v211, %v212
    %v214 = vrot.slane %v213, 2
    %v215 = vadd.f32 %v213, %v214
    %v216 = vrot.slane %v215, 1
    %v217 = vadd.f32 %v215, %v216
    %s218 = vtos %v217
    %v219 = vstv %s218
    %220 = vst [vmem:[#allocation9] sm:$0xff] %v219
    %v221 = vsel %vm204, %v200, 0.0
    %v222 = vsel %vm205, %v201, 0.0
    %v223 = vsel %vm206, %v221, 0.0
    %v224 = vsel %vm206, %v222, 0.0
    %v225 = vadd.f32 %v223, %v224
    %226 = vadd.xlane.f32.xlu0 %v225
    %v227 = vpop.xlane.xlu0 %226
    %v228 = vrot.slane %v227, 4
    %v229 = vadd.f32 %v227, %v228
    %v230 = vrot.slane %v229, 2
    %v231 = vadd.f32 %v229, %v230
    %v232 = vrot.slane %v231, 1
    %v233 = vadd.f32 %v231, %v232
    %s234 = vtos %v233
    %v235 = vstv %s234
    %236 = vst [vmem:[#allocation10] sm:$0xff] %v235
    %v237 = vsel %vm204, 1, 0
    %v238 = vsel %vm205, 1, 0
    %v239 = vsel %vm206, %v237, 0
    %v240 = vsel %vm206, %v238, 0
    %v241 = vadd.s32 %v239, %v240
    %v242 = vand.u32 %v241, 65535
    %v243 = vshrl.u32 %v241, 16
    %v244 = vcvt.s32.f32 %v242
    %v245 = vcvt.s32.f32 %v243
    %246 = vadd.xlane.f32.xlu0 %v244
    %v247 = vpop.xlane.xlu0 %246
    %248 = vadd.xlane.f32.xlu0 %v245
    %v249 = vpop.xlane.xlu0 %248
    %v250 = vcvt.f32.s32 %v247
    %v251 = vcvt.f32.s32 %v249
    %v252 = vshll.u32 %v251, 16
    %v253 = vadd.s32 %v252, %v250
    %v254 = vrot.slane %v253, 4
    %v255 = vadd.s32 %v253, %v254
    %v256 = vrot.slane %v255, 2
    %v257 = vadd.s32 %v255, %v256
    %v258 = vrot.slane %v257, 1
    %v259 = vadd.s32 %v257, %v258
    %s260 = vtos %v259
    %v261 = vstv %s260
    %262 = vst [vmem:[#allocation12] sm:$0xff] %v261
    // Predicated region
    $region18: #{tpu_custom_call.1} parent=1 // pred_check
      _
    $region19: #{tpu_custom_call.1} parent=1 // pred_check_branch
      %264 = sbr.rel (0) target = $region21
    $region20: #{tpu_custom_call.1} parent=1 // pred_region
      %s266 = ssub.s32 128, 128
      %267 = vsyncadd [#allocation6], %s266
      %s269 = sshll.u32 [#allocation9], 4
      %s270 = int_to_ptr.vmem [resolvable:$true] %s269
      %272 = dma.vmem_to_hbm [thread:$0]  %s270, 128, %s2, [#allocation6]
    $region21: #{tpu_custom_call.1} parent=1 // pred_fallthru
      _
    // Predicated region
    $region22: #{tpu_custom_call.1} parent=1 // pred_check
      _
    $region23: #{tpu_custom_call.1} parent=1 // pred_check_branch
      %274 = sbr.rel (0) target = $region25
    $region24: #{tpu_custom_call.1} parent=1 // pred_region
      %s276 = ssub.s32 128, 128
      %277 = vsyncadd [#allocation11], %s276
      %s279 = sshll.u32 [#allocation10], 4
      %s280 = int_to_ptr.vmem [resolvable:$true] %s279
      %282 = dma.vmem_to_hbm [thread:$0]  %s280, 128, %s3, [#allocation11]
    $region25: #{tpu_custom_call.1} parent=1 // pred_fallthru
      _
    // Predicated region
    $region26: #{tpu_custom_call.1} parent=1 // pred_check
      _
    $region27: #{tpu_custom_call.1} parent=1 // pred_check_branch
      %284 = sbr.rel (0) target = $region29
    $region28: #{tpu_custom_call.1} parent=1 // pred_region
      %s286 = ssub.s32 128, 128
      %287 = vsyncadd [#allocation11], %s286
      %s289 = sshll.u32 [#allocation12], 4
      %s290 = int_to_ptr.vmem [resolvable:$true] %s289
      %292 = dma.vmem_to_hbm [thread:$0]  %s290, 128, %s4, [#allocation11]
    $region29: #{tpu_custom_call.1} parent=1 // pred_fallthru
      _
    // Predicated region
    $region30: #{tpu_custom_call.1} parent=1 // pred_check
      _
    $region31: #{tpu_custom_call.1} parent=1 // pred_check_branch
      %294 = sbr.rel (0) target = $region33
    $region32: #{tpu_custom_call.1} parent=1 // pred_region
      %295 = dma.done [#allocation6], 128
    $region33: #{tpu_custom_call.1} parent=1 // pred_fallthru
      _
    // Predicated region
    $region34: #{tpu_custom_call.1} parent=1 // pred_check
      _
    $region35: #{tpu_custom_call.1} parent=1 // pred_check_branch
      %297 = sbr.rel (0) target = $region37
    $region36: #{tpu_custom_call.1} parent=1 // pred_region
      %298 = dma.done [#allocation11], 128
    $region37: #{tpu_custom_call.1} parent=1 // pred_fallthru
      _
    // Predicated region
    $region38: #{tpu_custom_call.1} parent=1 // pred_check
      _
    $region39: #{tpu_custom_call.1} parent=1 // pred_check_branch
      %300 = sbr.rel (0) target = $region41
    $region40: #{tpu_custom_call.1} parent=1 // pred_region
      %301 = dma.done [#allocation11], 128
    $region41: #{tpu_custom_call.1} parent=1 // pred_fallthru
      _
    %302 = vsyncpa [#allocation5], 1
    %303 = vsyncpa [#allocation8], 1
    %304 = vsyncpa [#allocation6], 1
    %305 = vsyncpa [#allocation11], 1

</llo_original>
